<compile_context>
chip_gen: v6e
topology: v6e:2x2x1
jax: 0.10.0
libtpu: 0.0.40
codegen_flags: <defaults>
</compile_context>

<pallas_src>
import functools

import jax
import jax.numpy as jnp
from jax.experimental import pallas as pl
from jax.experimental.pallas import tpu as pltpu


def _proj_kernel(x_ref, w_ref, b_ref, o_ref, *, e_out):
    # x_ref: (tm, K_pad) activations; w_ref: (K_pad, E_pad); b_ref: (1, E_pad) f32.
    acc = jnp.dot(x_ref[...], w_ref[...], preferred_element_type=jnp.float32)
    acc = acc + b_ref[...]
    # If E was lane-padded for the matmul, slice back before the store so the
    # caller never pays a post-kernel copy; no-op when E % 128 == 0.
    o_ref[...] = acc[:, :e_out].astype(o_ref.dtype)


def _round_up(x, m):
    return ((x + m - 1) // m) * m


def _choose_tm(M, tm_max):
    """Pick the M tile.

    Goals (perf review): big tiles (cap tm_max, default 1024) to amortise the
    ~0.35us per-grid-step overhead; at least 2 grid steps (v7x megacore) and
    preferably an EVEN count of >=8 steps so both TensorCores stay balanced
    and the DMA pipeline has depth; tm a multiple of 8 (sublane granularity).
    """
    m8 = _round_up(max(M, 1), 8)
    tm_max = max(8, min(tm_max, m8))
    steps = pl.cdiv(m8, tm_max)
    if m8 >= 16:
        steps = max(steps, 2)
    if m8 >= 8 * 256:                       # only when per-step tile stays >=256 rows
        steps = max(steps, 8)
    if steps % 2 and m8 >= 16:
        steps += 1                          # even step count for 2-core balance
    tm = _round_up(pl.cdiv(m8, steps), 8)
    return max(8, min(tm, tm_max))


def tubelet_projection(patches, w_flat, bias2d, *, e_out, out_dtype,
                       tm_max=1024, single_buffer_weights=False):
    """(M, K_pad) @ (K_pad, E_pad) + bias -> (M, e_out) on the MXU."""
    M, K = patches.shape
    _, E_pad = w_flat.shape
    tm = _choose_tm(M, tm_max)
    grid = (pl.cdiv(M, tm),)

    out_itemsize = jnp.dtype(out_dtype).itemsize
    cost = pl.CostEstimate(
        flops=2 * M * K * e_out,
        transcendentals=0,
        bytes_accessed=(
            patches.size * patches.dtype.itemsize
            + w_flat.size * w_flat.dtype.itemsize
            + bias2d.size * bias2d.dtype.itemsize
            + M * e_out * out_itemsize
        ),
    )

    # VMEM footprint: double-buffered activation + output tiles plus the
    # resident weight/bias.  v5e's scoped default is 16 MiB and tm=1024
    # overflows it, so set the limit explicitly; stay far below v7x's 64 MiB
    # physical VMEM.
    w_bufs = 1 if single_buffer_weights else 2
    vmem_need = (
        2 * tm * K * patches.dtype.itemsize
        + w_bufs * K * E_pad * w_flat.dtype.itemsize
        + w_bufs * E_pad * bias2d.dtype.itemsize
        + 2 * tm * E_pad * 4                       # f32-width worst case for output
    )
    vmem_limit = int(min(max(vmem_need + (8 << 20), 32 << 20), 100 << 20))

    # Resident operands (constant index_map).  pl.Buffered(1) reclaims their
    # pointless double-buffer (~2.25 MiB for K=1536, E=768 bf16); gated behind
    # a flag until validated on hardware.
    if single_buffer_weights:
        w_spec = pl.BlockSpec((K, E_pad), lambda i: (0, 0),
                              pipeline_mode=pl.Buffered(1))
        b_spec = pl.BlockSpec((1, E_pad), lambda i: (0, 0),
                              pipeline_mode=pl.Buffered(1))
    else:
        w_spec = pl.BlockSpec((K, E_pad), lambda i: (0, 0))
        b_spec = pl.BlockSpec((1, E_pad), lambda i: (0, 0))

    kernel = functools.partial(_proj_kernel, e_out=e_out)

    return pl.pallas_call(
        kernel,
        out_shape=jax.ShapeDtypeStruct((M, e_out), out_dtype),
        grid_spec=pltpu.PrefetchScalarGridSpec(
            num_scalar_prefetch=0,
            grid=grid,
            in_specs=[
                pl.BlockSpec((tm, K), lambda i: (i, 0)),   # streamed activations
                w_spec,                                    # resident weight
                b_spec,                                    # resident bias
            ],
            out_specs=pl.BlockSpec((tm, e_out), lambda i: (i, 0)),
        ),
        compiler_params=pltpu.CompilerParams(
            dimension_semantics=("parallel",),
            vmem_limit_bytes=vmem_limit,
            # Let XLA fold the cast+transpose producer of `patches` into the
            # pallas_call input pipeline when it considers the fusion legal.
            allow_input_fusion=[True, False, False],
        ),
        cost_estimate=cost,
    )(patches, w_flat, bias2d)


def vivit_tubelet_embeddings(
    pixel_values, conv_weight, conv_bias, tubelet_size,
    *, compute_dtype=jnp.bfloat16, out_dtype=None, tm_max=1024,
    single_buffer_weights=False,
):
    """
    pixel_values: (B, num_frames, C, H, W)
    conv_weight:  (hidden, C, kt, kh, kw)   (PyTorch Conv3d weight layout)
    conv_bias:    (hidden,)
    returns:      (B, seq_len, hidden), seq_len = (T//kt)*(H//kh)*(W//kw)

    compute_dtype: matmul operand dtype.  bfloat16 (default) uses the MXU's
        native path with f32 accumulation; pass jnp.float32 for numerics
        closer to PyTorch's f32 Conv3d.
    out_dtype: output dtype.  Defaults to the (floating) pixel dtype; pass
        jnp.bfloat16 to halve HBM writeback on the memory-bound v6e/v7x path
        when the downstream embedding stack is bf16.  Integer pixel dtypes are
        never propagated to the output.
    """
    B, T, C, H, W = pixel_values.shape
    kt, kh, kw = tubelet_size
    Tp, Hp, Wp = T // kt, H // kh, W // kw
    E = conv_weight.shape[0]
    K = C * kt * kh * kw

    if out_dtype is None:
        out_dtype = (pixel_values.dtype
                     if jnp.issubdtype(pixel_values.dtype, jnp.floating)
                     else jnp.float32)

    # --- patch gather (single fused XLA pass) --------------------------------
    # Cast to compute_dtype first (halves the transposed buffer for bf16), then
    # ONE fused transpose using the natural within-patch order (kt, C, kh, kw).
    # The tiny conv weight is permuted to match so the big video tensor moves
    # only once.  See the module-level TODO about fusing this into the kernel.
    x = pixel_values.astype(compute_dtype).reshape(B, Tp, kt, C, Hp, kh, Wp, kw)
    x = jnp.transpose(x, (0, 1, 4, 6, 2, 3, 5, 7))
    patches = x.reshape(B * Tp * Hp * Wp, K)

    w_flat = (
        jnp.transpose(conv_weight, (0, 2, 1, 3, 4)).reshape(E, K).T
    ).astype(compute_dtype)                       # (K, E), rows in (kt,C,kh,kw) order
    bias2d = conv_bias.astype(jnp.float32).reshape(1, E)

    # --- lane alignment -------------------------------------------------------
    # Contraction dim padded to a multiple of 128 lanes (no-op for the standard
    # config, K=1536).  Zero rows in the weight keep the result exact.
    K_pad = _round_up(K, 128)
    if K_pad != K:
        patches = jnp.pad(patches, ((0, 0), (0, K_pad - K)))
        w_flat = jnp.pad(w_flat, ((0, K_pad - K), (0, 0)))

    # Output dim padded to a multiple of 128 so the weight / matmul result are
    # lane-dense; the kernel slices back to E before storing, so there is no
    # post-kernel slice pass (no-op for hidden=768/1024).
    E_pad = _round_up(E, 128)
    if E_pad != E:
        w_flat = jnp.pad(w_flat, ((0, 0), (0, E_pad - E)))
        bias2d = jnp.pad(bias2d, ((0, 0), (0, E_pad - E)))

    out = tubelet_projection(
        patches, w_flat, bias2d,
        e_out=E, out_dtype=out_dtype, tm_max=tm_max,
        single_buffer_weights=single_buffer_weights,
    )
    return out.reshape(B, Tp * Hp * Wp, E)


if __name__ == "__main__":
    # Small config: num_frames=8, num_channels=4, image_size=(16,16),
    # tubelet_size=(2,4,4), hidden_size=32 -> seq_len = 4*4*4 = 64, K = 128.
    B, T, C, H, W = 2, 8, 4, 16, 16
    tubelet_size = (2, 4, 4)
    hidden = 32

    key = jax.random.PRNGKey(0)
    k_x, k_w, k_b = jax.random.split(key, 3)

    pixel_values = jax.random.normal(k_x, (B, T, C, H, W), dtype=jnp.float32)
    conv_weight = (
        jax.random.normal(k_w, (hidden, C) + tubelet_size, dtype=jnp.float32) * 0.02
    )
    conv_bias = jax.random.normal(k_b, (hidden,), dtype=jnp.float32) * 0.02

    # Pure-JAX f32 reference of the same math (Conv3d with stride == kernel).
    kt, kh, kw = tubelet_size
    Tp, Hp, Wp = T // kt, H // kh, W // kw
    xr = pixel_values.reshape(B, Tp, kt, C, Hp, kh, Wp, kw)
    xr = jnp.transpose(xr, (0, 1, 4, 6, 2, 3, 5, 7)).reshape(
        B, Tp * Hp * Wp, C * kt * kh * kw
    )
    wr = jnp.transpose(conv_weight, (0, 2, 1, 3, 4)).reshape(hidden, -1)
    ref = (
        jnp.einsum("bsk,ek->bse", xr, wr, precision=jax.lax.Precision.HIGHEST)
        + conv_bias
    )

    # 1) Default path: bf16 operands, f32 accumulation, f32 output.
    out = vivit_tubelet_embeddings(pixel_values, conv_weight, conv_bias, tubelet_size)
    out = jax.block_until_ready(out)
    assert out.shape == (B, Tp * Hp * Wp, hidden), out.shape
    assert out.dtype == jnp.float32, out.dtype
    err = float(jnp.max(jnp.abs(out - ref)))
    assert jnp.allclose(out, ref, atol=2e-2, rtol=2e-2), err

    # 2) f32-operand path (numerics closer to the PyTorch f32 Conv3d).
    out_f32 = vivit_tubelet_embeddings(
        pixel_values, conv_weight, conv_bias, tubelet_size,
        compute_dtype=jnp.float32)
    out_f32 = jax.block_until_ready(out_f32)
    err_f32 = float(jnp.max(jnp.abs(out_f32 - ref)))
    assert jnp.allclose(out_f32, ref, atol=1e-2, rtol=1e-2), err_f32

    # 3) bf16-output path (halves writeback on the memory-bound v6e/v7x path).
    out_bf16 = vivit_tubelet_embeddings(
        pixel_values, conv_weight, conv_bias, tubelet_size,
        out_dtype=jnp.bfloat16)
    out_bf16 = jax.block_until_ready(out_bf16)
    assert out_bf16.dtype == jnp.bfloat16, out_bf16.dtype
    err_bf16 = float(jnp.max(jnp.abs(out_bf16.astype(jnp.float32) - ref)))
    assert jnp.allclose(out_bf16.astype(jnp.float32), ref, atol=3e-2, rtol=3e-2), err_bf16

    print("KERNEL_OK")
</pallas_src>

<mosaic_0001>
module attributes {stable_mosaic.version = 11 : i64} {
  func.func @_proj_kernel(%arg0: i32, %arg1: memref<64x128xbf16, #tpu.memory_space<vmem>>, %arg2: memref<128x128xbf16, #tpu.memory_space<vmem>>, %arg3: memref<1x128xf32, #tpu.memory_space<vmem>>, %arg4: memref<64x32xf32, #tpu.memory_space<vmem>>) attributes {dimension_semantics = [#tpu.dimension_semantics<parallel>], iteration_bounds = array<i64: 2>, scalar_prefetch = 0 : i64, scratch_operands = 0 : i64, tpu.core_type = #tpu.core_type<tc>, window_params = [{transform_indices = @transform_0, window_bounds = array<i64: 64, 128>}, {pipeline_mode = #tpu.pipeline_mode<synchronous>, transform_indices = @transform_1, window_bounds = array<i64: 128, 128>}, {pipeline_mode = #tpu.pipeline_mode<synchronous>, transform_indices = @transform_2, window_bounds = array<i64: 1, 128>}, {transform_indices = @transform_3, window_bounds = array<i64: 64, 32>}]} {
    %c0 = arith.constant 0 : index
    %c0_0 = arith.constant 0 : index
    %0 = vector.load %arg1[%c0, %c0_0] : memref<64x128xbf16, #tpu.memory_space<vmem>>, vector<64x128xbf16>
    %c0_1 = arith.constant 0 : index
    %c0_2 = arith.constant 0 : index
    %1 = vector.load %arg2[%c0_1, %c0_2] : memref<128x128xbf16, #tpu.memory_space<vmem>>, vector<128x128xbf16>
    %cst = arith.constant dense<0.000000e+00> : vector<64x128xf32>
    %2 = tpu.matmul %0, %1, %cst {dimension_numbers = #tpu.dot_dimension_numbers<[1], [0], [0], [1], [0, 0, 1, 1], [], []>} : vector<64x128xbf16>, vector<128x128xbf16>, vector<64x128xf32> -> vector<64x128xf32>
    %c0_3 = arith.constant 0 : index
    %c0_4 = arith.constant 0 : index
    %3 = vector.load %arg3[%c0_3, %c0_4] : memref<1x128xf32, #tpu.memory_space<vmem>>, vector<1x128xf32>
    %4 = vector.broadcast %3 : vector<1x128xf32> to vector<64x128xf32>
    %5 = arith.addf %2, %4 : vector<64x128xf32>
    %6 = vector.extract_strided_slice %5 {offsets = [0, 0], sizes = [64, 32], strides = [1, 1]} : vector<64x128xf32> to vector<64x32xf32>
    %c0_5 = arith.constant 0 : index
    %c0_6 = arith.constant 0 : index
    %7 = vector.load %arg4[%c0_5, %c0_6] : memref<64x32xf32, #tpu.memory_space<vmem>>, vector<64x32xf32>
    tpu.vector_store %arg4[%c0_5, %c0_6], %6 {strides = array<i32>} : memref<64x32xf32, #tpu.memory_space<vmem>>, vector<64x32xf32>,
    return
  }
  func.func @transform_0(%arg0: i32) -> (i32, i32) {
    %c0_i32 = arith.constant 0 : i32
    %c0_i32_0 = arith.constant 0 : i32
    return %arg0, %c0_i32 : i32, i32
  }
  func.func @transform_1(%arg0: i32) -> (i32, i32) {
    %c0_i32 = arith.constant 0 : i32
    %c0_i32_0 = arith.constant 0 : i32
    %c0_i32_1 = arith.constant 0 : i32
    return %c0_i32, %c0_i32_0 : i32, i32
  }
  func.func @transform_2(%arg0: i32) -> (i32, i32) {
    %c0_i32 = arith.constant 0 : i32
    %c0_i32_0 = arith.constant 0 : i32
    %c0_i32_1 = arith.constant 0 : i32
    return %c0_i32, %c0_i32_0 : i32, i32
  }
  func.func @transform_3(%arg0: i32) -> (i32, i32) {
    %c0_i32 = arith.constant 0 : i32
    %c0_i32_0 = arith.constant 0 : i32
    return %arg0, %c0_i32 : i32, i32
  }
}

</mosaic_0001>

<llo_original>
// kernel: tpu_custom_call.1
$region0: #{tpu_custom_call.1}
  #allocation0 [shape = 'u32[]', space=smem, size = 0x4, offset = 0x4, fixed_abs, tag = 'smem constant byte address 0x4 - core index']
  #allocation1 [shape = 'u32[144,128]{1,0:T(1,128)}', space=vmem, size = 0x12000, scoped, tag = 'internal scratch']
  %s0 = inlined_call_operand.hbm [shape: bf16[128,128], index: 0, kind: input, shape index: {}]
  %s1 = inlined_call_operand.hbm [shape: bf16[128,128], index: 1, kind: input, shape index: {}]
  %s2 = inlined_call_operand.vmem [shape: f32[1,128], index: 2, kind: input, shape index: {}]
  %s3 = inlined_call_operand.vmem [shape: f32[128,32], index: 3, kind: output, shape index: {}]
  %s4 = sld [smem:[#allocation0]]
  $region53: #{tpu_custom_call.1} parent=0
    _
  %s6 = ssub.s32 1, %s4
  %s7 = scalar_select 0, %s6, %s4
  $region1: #{tpu_custom_call.1} parent=0
    #allocation2 [shape = 'u8[32768]{0}', space=vmem, size = 0x8000, scoped, tag = 'input window, operand 0']
    #allocation3 [shape = 's32[2]{0}', space=sflag, size = 0x8, scoped, tag = 'scoped memory for tpu_custom_call.1']
    #allocation4 [shape = 'u8[32768]{0}', space=vmem, size = 0x8000, scoped, tag = 'input window, operand 1, single buffered']
    #allocation5 [shape = 's32[1]{0}', space=sflag, size = 0x4, scoped, tag = 'scoped memory for tpu_custom_call.1']
    %8 = vsyncpa [#allocation3], 0
    %s9 = scalar_lea.sflag [#allocation3], 1
    %10 = vsyncpa %s9, 0
    %11 = vsyncpa [#allocation5], 0
    loop: start=0, step=1, limit=4
    $region2: #{tpu_custom_call.1} parent=1 // loop_pre_header
      _
    $region3: #{tpu_custom_call.1} parent=1 // loop_header
      %s13 = sphi 0, %s17
      %p14 = scmp.ge.s32.totalorder %s13, 4
      %s23 = sphi 0, %s25
      %s26 = sphi 0, %s23
      %s27 = sphi 0, %s26
      %s43 = sphi 0, %s27
      %s47 = sphi 0, %s47
      %s49 = sphi 0, %s47
      %s50 = sphi 0, %s49
      %s64 = sphi 0, %s50
      %s68 = sphi 0, %s68
      %s70 = sphi 0, %s68
      %s71 = sphi 0, %s70
      %s85 = sphi 0, %s71
      %s91 = sphi 0, %s93
      %s94 = sphi 0, %s91
      %s95 = sphi 0, %s94
      %s111 = sphi 0, %s95
    $region4: #{tpu_custom_call.1} parent=1 // loop_header_branch
      %16 = sbr.rel (%p14) target = $region8
    $region5: #{tpu_custom_call.1} parent=1 // loop_body
      %s18 = ssub.s32 %s13, 1
      %s19 = ssub.s32 %s13, 2
      %s20 = sadd.s32 %s13, 1
      %s21 = ssub.s32 %s13, %s20
      %p22 = scmp.eq.s32.totalorder %s21, 0
      %s24 = sadd.s32 %s23, 1
      %s25 = scalar_select %p22, %s23, %s24
      %p28 = pneg %p22
      %p29 = scmp.eq.s32.totalorder %s13, 1
      %p30 = por %p28, %p29
      %p31 = scmp.ne.s32.totalorder %s23, %s26
      %p32 = scmp.eq.s32.totalorder %s13, 0
      %p33 = por %p31, %p32
      %p34 = scmp.ne.s32.totalorder %s23, %s26
      %p35 = scmp.eq.s32.totalorder %s18, 1
      %p36 = por %p34, %p35
      %p37 = scmp.ne.s32.totalorder %s26, %s27
      %p38 = scmp.eq.s32.totalorder %s18, 0
      %p39 = por %p37, %p38
      %p40 = scmp.ne.s32.totalorder %s26, %s27
      %p41 = scmp.eq.s32.totalorder %s19, 1
      %p42 = por %p40, %p41
      %p44 = scmp.ne.s32.totalorder %s27, %s43
      %p45 = scmp.eq.s32.totalorder %s19, 0
      %p46 = por %p44, %p45
      %s48 = sadd.s32 %s47, 1
      %p51 = scmp.eq.s32.totalorder %s13, 1
      %p52 = scmp.ne.s32.totalorder %s47, %s49
      %p53 = scmp.eq.s32.totalorder %s13, 0
      %p54 = por %p52, %p53
      %p55 = scmp.ne.s32.totalorder %s47, %s49
      %p56 = scmp.eq.s32.totalorder %s18, 1
      %p57 = por %p55, %p56
      %p58 = scmp.ne.s32.totalorder %s49, %s50
      %p59 = scmp.eq.s32.totalorder %s18, 0
      %p60 = por %p58, %p59
      %p61 = scmp.ne.s32.totalorder %s49, %s50
      %p62 = scmp.eq.s32.totalorder %s19, 1
      %p63 = por %p61, %p62
      %p65 = scmp.ne.s32.totalorder %s50, %s64
      %p66 = scmp.eq.s32.totalorder %s19, 0
      %p67 = por %p65, %p66
      %s69 = sadd.s32 %s68, 1
      %p72 = scmp.eq.s32.totalorder %s13, 1
      %p73 = scmp.ne.s32.totalorder %s68, %s70
      %p74 = scmp.eq.s32.totalorder %s13, 0
      %p75 = por %p73, %p74
      %p76 = scmp.ne.s32.totalorder %s68, %s70
      %p77 = scmp.eq.s32.totalorder %s18, 1
      %p78 = por %p76, %p77
      %p79 = scmp.ne.s32.totalorder %s70, %s71
      %p80 = scmp.eq.s32.totalorder %s18, 0
      %p81 = por %p79, %p80
      %p82 = scmp.ne.s32.totalorder %s70, %s71
      %p83 = scmp.eq.s32.totalorder %s19, 1
      %p84 = por %p82, %p83
      %p86 = scmp.ne.s32.totalorder %s71, %s85
      %p87 = scmp.eq.s32.totalorder %s19, 0
      %p88 = por %p86, %p87
      %s89 = ssub.s32 %s13, %s20
      %p90 = scmp.eq.s32.totalorder %s89, 0
      %s92 = sadd.s32 %s91, 1
      %s93 = scalar_select %p90, %s91, %s92
      %p96 = pneg %p90
      %p97 = scmp.eq.s32.totalorder %s13, 1
      %p98 = por %p96, %p97
      %p99 = scmp.ne.s32.totalorder %s91, %s94
      %p100 = scmp.eq.s32.totalorder %s13, 0
      %p101 = por %p99, %p100
      %p102 = scmp.ne.s32.totalorder %s91, %s94
      %p103 = scmp.eq.s32.totalorder %s18, 1
      %p104 = por %p102, %p103
      %p105 = scmp.ne.s32.totalorder %s94, %s95
      %p106 = scmp.eq.s32.totalorder %s18, 0
      %p107 = por %p105, %p106
      %p108 = scmp.ne.s32.totalorder %s94, %s95
      %p109 = scmp.eq.s32.totalorder %s19, 1
      %p110 = por %p108, %p109
      %p112 = scmp.ne.s32.totalorder %s95, %s111
      %p113 = scmp.eq.s32.totalorder %s19, 0
      %p114 = por %p112, %p113
      %p115 = scmp.le.s32.totalorder 1, %s13
      %p116 = scmp.lt.s32.totalorder %s13, 3
      %p117 = pnand %p115, %p116
      %p118 = pneg %p117
      // Predicated region
      $region9: #{tpu_custom_call.1} parent=5 // pred_check
        _
      $region10: #{tpu_custom_call.1} parent=5 // pred_check_branch
        %120 = sbr.rel (%p117) target = $region12
      $region11: #{tpu_custom_call.1} parent=5 // pred_region
        %s121 = ssub.s32 %s13, 1
        // Predicated region
        $region13: #{tpu_custom_call.1} parent=11 // pred_check
          %p122 = pneg %p60
        $region14: #{tpu_custom_call.1} parent=11 // pred_check_branch
          %124 = sbr.rel (%p122) target = $region16
        $region15: #{tpu_custom_call.1} parent=11 // pred_region
          %s126 = ssub.s32 1024, 1024
          %127 = vsyncadd [#allocation5], %s126
          %s128 = sshll.u32 [#allocation4], 4
          %s129 = int_to_ptr.vmem [resolvable:$true] %s128
          %134 = dma.hbm_to_vmem [thread:$0]  %s1, 1024, %s129, [#allocation5], 64, 64, 4
        $region16: #{tpu_custom_call.1} parent=11 // pred_fallthru
          _
        // Predicated region
        $region17: #{tpu_custom_call.1} parent=11 // pred_check
          %p135 = pneg %p81
        $region18: #{tpu_custom_call.1} parent=11 // pred_check_branch
          %137 = sbr.rel (%p135) target = $region20
        $region19: #{tpu_custom_call.1} parent=11 // pred_region
          _
        $region20: #{tpu_custom_call.1} parent=11 // pred_fallthru
          _
      $region12: #{tpu_custom_call.1} parent=5 // pred_fallthru
        _
      %p138 = scmp.lt.s32.totalorder %s13, 2
      // Predicated region
      $region21: #{tpu_custom_call.1} parent=5 // pred_check
        %p139 = pneg %p138
      $region22: #{tpu_custom_call.1} parent=5 // pred_check_branch
        %141 = sbr.rel (%p139) target = $region24
      $region23: #{tpu_custom_call.1} parent=5 // pred_region
        // Predicated region
        $region25: #{tpu_custom_call.1} parent=23 // pred_check
          %p142 = pneg %p33
        $region26: #{tpu_custom_call.1} parent=23 // pred_check_branch
          %144 = sbr.rel (%p142) target = $region28
        $region27: #{tpu_custom_call.1} parent=23 // pred_region
          %s145 = sand.u32 %s23, 1
          %s146 = scalar_lea.sflag [#allocation3], %s145
          %s147 = sand.u32 %s23, 1
          %s148 = smul.addr %s147, 32
          %s149 = scalar_lea.vmem [#allocation2], %s148
          %s150 = smul.u32 8, %s13
          %s152 = ssub.s32 512, 512
          %153 = vsyncadd %s146, %s152
          %s154 = smul.addr %s150, 64
          %s155 = scalar_lea.hbm %s0, %s154
          %s156 = sshll.u32 %s149, 4
          %s157 = int_to_ptr.vmem [resolvable:$true] %s156
          %162 = dma.hbm_to_vmem [thread:$0]  %s155, 512, %s157, %s146, 64, 64, 4
        $region28: #{tpu_custom_call.1} parent=23 // pred_fallthru
          _
      $region24: #{tpu_custom_call.1} parent=5 // pred_fallthru
        _
      %p163 = scmp.le.s32.totalorder 1, %s13
      %p164 = scmp.lt.s32.totalorder %s13, 3
      %p165 = pnand %p163, %p164
      %p166 = pneg %p165
      // Predicated region
      $region29: #{tpu_custom_call.1} parent=5 // pred_check
        _
      $region30: #{tpu_custom_call.1} parent=5 // pred_check_branch
        %168 = sbr.rel (%p165) target = $region32
      $region31: #{tpu_custom_call.1} parent=5 // pred_region
        %s169 = ssub.s32 %s13, 1
        %s170 = sand.u32 %s26, 1
        %s171 = scalar_lea.sflag [#allocation3], %s170
        %s172 = sand.u32 %s26, 1
        %s173 = smul.addr %s172, 32
        %s174 = scalar_lea.vmem [#allocation2], %s173
        // Predicated region
        $region33: #{tpu_custom_call.1} parent=31 // pred_check
          %p175 = pneg %p39
        $region34: #{tpu_custom_call.1} parent=31 // pred_check_branch
          %177 = sbr.rel (%p175) target = $region36
        $region35: #{tpu_custom_call.1} parent=31 // pred_region
          %178 = dma.done %s171, 512
        $region36: #{tpu_custom_call.1} parent=31 // pred_fallthru
          _
        // Predicated region
        $region37: #{tpu_custom_call.1} parent=31 // pred_check
          %p179 = pneg %p60
        $region38: #{tpu_custom_call.1} parent=31 // pred_check_branch
          %181 = sbr.rel (%p179) target = $region40
        $region39: #{tpu_custom_call.1} parent=31 // pred_region
          %182 = dma.done [#allocation5], 1024
        $region40: #{tpu_custom_call.1} parent=31 // pred_fallthru
          _
        %s183 = sand.u32 %s26, 1
        %s184 = scalar_lea.sflag [#allocation3], %s183
        %s185 = sand.u32 %s26, 1
        %s186 = smul.addr %s185, 32
        %s187 = scalar_lea.vmem [#allocation2], %s186
        %p188 = pneg %p39
        %p189 = pneg %p36
        %p190 = pneg %p60
        %p191 = pneg %p57
        %p192 = pneg %p81
        %p193 = pneg %p78
        %p194 = pneg %p107
        %p195 = pneg %p104
        %s196 = smul.u32 8, %s18
        %p197 = scmp.lt.s32.totalorder %s196, 15
        %s198 = scalar_select %p197, %s196, 15
        %s199 = smul.addr %s198, 8
        %s200 = scalar_lea.vmem %s3, %s199
        %s201 = smul.u32 8, %s18
        %s202 = smul.u32 8, %s18
        %p203 = scmp.lt.s32.totalorder %s202, 15
        %s204 = scalar_select %p203, %s202, 15
        %s205 = smul.addr %s204, 8
        %s206 = scalar_lea.vmem %s3, %s205
        %s207 = smul.u32 8, %s18
        %v209 = vld [vmem:[%s174] sm:$0xf]
        %v210 = vld [vmem:[%s174 + $0x4] sm:$0xf]
        %v211 = vld [vmem:[%s174 + $0x8] sm:$0xf]
        %v212 = vld [vmem:[%s174 + $0xc] sm:$0xf]
        %v213 = vld [vmem:[%s174 + $0x10] sm:$0xf]
        %v214 = vld [vmem:[%s174 + $0x14] sm:$0xf]
        %v215 = vld [vmem:[%s174 + $0x18] sm:$0xf]
        %v216 = vld [vmem:[%s174 + $0x1c] sm:$0xf]
        %v217 = vld [vmem:[#allocation4] sm:$0xf]
        %v218 = vld [vmem:[#allocation4 + $0x4] sm:$0xf]
        %v219 = vld [vmem:[#allocation4 + $0x8] sm:$0xf]
        %v220 = vld [vmem:[#allocation4 + $0xc] sm:$0xf]
        %v221 = vld [vmem:[#allocation4 + $0x10] sm:$0xf]
        %v222 = vld [vmem:[#allocation4 + $0x14] sm:$0xf]
        %v223 = vld [vmem:[#allocation4 + $0x18] sm:$0xf]
        %v224 = vld [vmem:[#allocation4 + $0x1c] sm:$0xf]
        %v225 = vld [vmem:[#allocation4 + $0x20] sm:$0xf]
        %v226 = vld [vmem:[#allocation4 + $0x24] sm:$0xf]
        %v227 = vld [vmem:[#allocation4 + $0x28] sm:$0xf]
        %v228 = vld [vmem:[#allocation4 + $0x2c] sm:$0xf]
        %v229 = vld [vmem:[#allocation4 + $0x30] sm:$0xf]
        %v230 = vld [vmem:[#allocation4 + $0x34] sm:$0xf]
        %v231 = vld [vmem:[#allocation4 + $0x38] sm:$0xf]
        %v232 = vld [vmem:[#allocation4 + $0x3c] sm:$0xf]
        %v233 = vld [vmem:[%s2] sm:$0x1]
        %v235 = vlaneseq
        %v236 = vshrl.u32 %v235, 7
        %v237 = vsub.s32 0, %v236
        %v238 = vrot.slane %v233, %v237
        %v248 = vunpack.c.l.b16 %v209
        %v249 = vunpack.c.l.b16 %v210
        %v250 = vunpack.c.l.b16 %v211
        %v251 = vunpack.c.l.b16 %v212
        %v252 = vunpack.c.l.b16 %v213
        %v253 = vunpack.c.l.b16 %v214
        %v254 = vunpack.c.l.b16 %v215
        %v255 = vunpack.c.l.b16 %v216
        %v256 = vpack.c.b16 %v249, %v248
        %v257 = vpack.c.b16 %v251, %v250
        %v258 = vpack.c.b16 %v253, %v252
        %v259 = vpack.c.b16 %v255, %v254
        %v280 = vunpack.c.l.b16 %v217
        %v281 = vunpack.c.l.b16 %v218
        %v282 = vunpack.c.l.b16 %v219
        %v283 = vunpack.c.l.b16 %v220
        %v284 = vunpack.c.l.b16 %v221
        %v285 = vunpack.c.l.b16 %v222
        %v286 = vunpack.c.l.b16 %v223
        %v287 = vunpack.c.l.b16 %v224
        %v288 = vunpack.c.l.b16 %v225
        %v289 = vunpack.c.l.b16 %v226
        %v290 = vunpack.c.l.b16 %v227
        %v291 = vunpack.c.l.b16 %v228
        %v292 = vunpack.c.l.b16 %v229
        %v293 = vunpack.c.l.b16 %v230
        %v294 = vunpack.c.l.b16 %v231
        %v295 = vunpack.c.l.b16 %v232
        %v296 = vpack.c.b16 %v281, %v280
        %v297 = vpack.c.b16 %v283, %v282
        %v298 = vpack.c.b16 %v285, %v284
        %v299 = vpack.c.b16 %v287, %v286
        %v300 = vpack.c.b16 %v289, %v288
        %v301 = vpack.c.b16 %v291, %v290
        %v302 = vpack.c.b16 %v293, %v292
        %v303 = vpack.c.b16 %v295, %v294
        %312 = vmatprep.subr.bf16.mxu0 0
        %313 = vmatpush1.bf16.msra.mxu0 %v303
        %314 = vmatprep.subr.bf16.mxu0 0
        %315 = vmatpush1.bf16.msra.mxu0 %v302
        %316 = vmatprep.subr.bf16.mxu0 0
        %317 = vmatpush1.bf16.msra.mxu0 %v301
        %318 = vmatprep.subr.bf16.mxu0 0
        %319 = vmatpush1.bf16.msra.mxu0 %v300
        %320 = vmatprep.subr.bf16.mxu0 0
        %321 = vmatpush1.bf16.msra.mxu0 %v299
        %322 = vmatprep.subr.bf16.mxu0 0
        %323 = vmatpush1.bf16.msra.mxu0 %v298
        %324 = vmatprep.subr.bf16.mxu0 0
        %325 = vmatpush1.bf16.msra.mxu0 %v297
        %326 = vmatprep.subr.bf16.mxu0 0
        %327 = vmatpush1.bf16.msra.mxu0 %v296
        %328 = vmatprep.subr.bf16.mxu0 0
        %329 = vmatpush2.bf16.msra.mxu0 0
        %330 = vmatprep.subr.bf16.mxu0 0
        %331 = vmatpush2.bf16.msra.mxu0 0
        %332 = vmatprep.subr.bf16.mxu0 0
        %333 = vmatpush2.bf16.msra.mxu0 0
        %334 = vmatprep.subr.bf16.mxu0 0
        %335 = vmatpush2.bf16.msra.mxu0 0
        %336 = vmatprep.subr.bf16.mxu0 0
        %337 = vmatpush2.bf16.msra.mxu0 0
        %338 = vmatprep.subr.bf16.mxu0 0
        %339 = vmatpush2.bf16.msra.mxu0 0
        %340 = vmatprep.subr.bf16.mxu0 0
        %341 = vmatpush2.bf16.msra.mxu0 0
        %342 = vmatprep.subr.bf16.mxu0 0
        %343 = vmatpush2.bf16.msra.mxu0 0
        %344 = vmatprep.mubr.bf16.mxu0 0
        %345 = vmatmul.mubr.bf16.gmra.mxu0 %v256
        %v346 = vpop.f32.mrf.mxu0
        %v347 = vadd.f32 %v238, %v346
        %v348 = vpop.f32.mrf.mxu0
        %v349 = vpop.f32.mrf.mxu0
        %v350 = vadd.f32 %v238, %v349
        %v351 = vpop.f32.mrf.mxu0
        %352 = vmatprep.mubr.bf16.mxu0 0
        %353 = vmatmul.mubr.bf16.gmra.mxu0 %v257
        %v354 = vpop.f32.mrf.mxu0
        %v355 = vadd.f32 %v238, %v354
        %v356 = vpop.f32.mrf.mxu0
        %v357 = vpop.f32.mrf.mxu0
        %v358 = vadd.f32 %v238, %v357
        %v359 = vpop.f32.mrf.mxu0
        %360 = vmatprep.mubr.bf16.mxu0 0
        %361 = vmatmul.mubr.bf16.gmra.mxu0 %v258
        %v362 = vpop.f32.mrf.mxu0
        %v363 = vadd.f32 %v238, %v362
        %v364 = vpop.f32.mrf.mxu0
        %v365 = vpop.f32.mrf.mxu0
        %v366 = vadd.f32 %v238, %v365
        %v367 = vpop.f32.mrf.mxu0
        %368 = vmatprep.mubr.bf16.mxu0 0
        %369 = vmatmul.mubr.bf16.gmra.mxu0 %v259
        %v370 = vpop.f32.mrf.mxu0
        %v371 = vadd.f32 %v238, %v370
        %v372 = vpop.f32.mrf.mxu0
        %v373 = vpop.f32.mrf.mxu0
        %v374 = vadd.f32 %v238, %v373
        %v375 = vpop.f32.mrf.mxu0
        %376 = vdwg.mxu0
        %vm377 = vcmask 261120
        %378 = vst.msk [vmem:[%s206] sm:$0xff] %vm377, %v347
        %379 = vst.msk [vmem:[%s206 + $0x8] sm:$0xff] %vm377, %v350
        %380 = vst.msk [vmem:[%s206 + $0x10] sm:$0xff] %vm377, %v355
        %381 = vst.msk [vmem:[%s206 + $0x18] sm:$0xff] %vm377, %v358
        %382 = vst.msk [vmem:[%s206 + $0x20] sm:$0xff] %vm377, %v363
        %383 = vst.msk [vmem:[%s206 + $0x28] sm:$0xff] %vm377, %v366
        %384 = vst.msk [vmem:[%s206 + $0x30] sm:$0xff] %vm377, %v371
        %385 = vst.msk [vmem:[%s206 + $0x38] sm:$0xff] %vm377, %v374
        %s386 = smul.u32 8, %s18
        %p387 = scmp.lt.s32.totalorder %s386, 15
        %s388 = scalar_select %p387, %s386, 15
        %s389 = smul.addr %s388, 8
        %s390 = scalar_lea.vmem %s3, %s389
        // Predicated region
        $region41: #{tpu_custom_call.1} parent=31 // pred_check
          %p391 = pneg %p104
        $region42: #{tpu_custom_call.1} parent=31 // pred_check_branch
          %393 = sbr.rel (%p391) target = $region44
        $region43: #{tpu_custom_call.1} parent=31 // pred_region
          %s394 = smul.u32 8, %s18
        $region44: #{tpu_custom_call.1} parent=31 // pred_fallthru
          _
      $region32: #{tpu_custom_call.1} parent=5 // pred_fallthru
        _
      %p395 = scmp.le.s32.totalorder 2, %s13
      // Predicated region
      $region45: #{tpu_custom_call.1} parent=5 // pred_check
        %p396 = pneg %p395
      $region46: #{tpu_custom_call.1} parent=5 // pred_check_branch
        %398 = sbr.rel (%p396) target = $region48
      $region47: #{tpu_custom_call.1} parent=5 // pred_region
        %s399 = ssub.s32 %s13, 2
        // Predicated region
        $region49: #{tpu_custom_call.1} parent=47 // pred_check
          %p400 = pneg %p110
        $region50: #{tpu_custom_call.1} parent=47 // pred_check_branch
          %402 = sbr.rel (%p400) target = $region52
        $region51: #{tpu_custom_call.1} parent=47 // pred_region
          %s403 = smul.u32 8, %s19
          %p404 = scmp.lt.s32.totalorder %s403, 15
          %s405 = scalar_select %p404, %s403, 15
          %s406 = smul.addr %s405, 8
          %s407 = scalar_lea.vmem %s3, %s406
        $region52: #{tpu_custom_call.1} parent=47 // pred_fallthru
          _
      $region48: #{tpu_custom_call.1} parent=5 // pred_fallthru
        _
    $region6: #{tpu_custom_call.1} parent=1 // loop_footer
      %s17 = sadd.s32 1, %s13
    $region7: #{tpu_custom_call.1} parent=1 // loop_footer_branch
      %12 = sbr.rel target = $region3
    $region8: #{tpu_custom_call.1} parent=1 // loop_exit
      _
    %408 = vsyncpa [#allocation3], 1
    %s409 = scalar_lea.sflag [#allocation3], 1
    %410 = vsyncpa %s409, 1
    %411 = vsyncpa [#allocation5], 1

</llo_original>
